<compile_context>
chip_gen: v6e
topology: v6e:2x2x1
jax: 0.10.0
libtpu: 0.0.40
codegen_flags: <defaults>
</compile_context>

<pallas_src>
import functools

import jax
import jax.numpy as jnp
from jax import lax
from jax.experimental import pallas as pl
from jax.experimental.pallas import tpu as pltpu


# ---------------------------------------------------------------------------
# Fast path: odd kernel_size (H_out == H, W_out == W) — lane-dense flat layout
# ---------------------------------------------------------------------------
def _smooth_pool_flat_kernel(x_ref, inv_ref, mask_ref, o_ref, xp_ref, *,
                             k, pad, W, HW, ML, M, G):
    # x_ref:    (G, HW)            input block (planes flattened to H*W lanes)
    # inv_ref:  (1, HW)   f32      exact 1/valid_count, resident
    # mask_ref: (k, HW)   f32      per-offset column-validity masks, resident
    # o_ref:    (G, HW)            output block
    # xp_ref:   (G, ML+HW+M) f32   zero-margined flat scratch

    # Re-zero only the thin margins each step (interior is fully overwritten).
    if M > 0:
        xp_ref[:, 0:ML] = jnp.zeros((G, ML), jnp.float32)
        xp_ref[:, ML + HW:ML + HW + M] = jnp.zeros((G, M), jnp.float32)

    # Single hoisted cast; 128-lane-aligned dense store into the interior.
    xp_ref[:, ML:ML + HW] = x_ref[...].astype(jnp.float32)

    # Stage 1: vertical (row-direction) window sums over the extended range
    # [-pad, HW+pad): k static flat-offset slabs (offset step = W).
    ext = HW + 2 * pad
    base = ML - M
    r = xp_ref[:, base:base + ext]
    for di in range(1, k):
        s = base + di * W
        r = r + xp_ref[:, s:s + ext]

    # Stage 2: horizontal (column-direction) sums; masks zero the terms that
    # would wrap around a row boundary in the flat layout.  The center term
    # (dj == pad) never wraps, so it is unmasked.
    acc = None
    for dj in range(k):
        term = r[:, dj:dj + HW]
        if dj != pad:
            term = term * mask_ref[dj:dj + 1, :]
        acc = term if acc is None else acc + term

    # count_include_pad=False: multiply by precomputed exact inverse counts.
    o_ref[...] = (acc * inv_ref[...]).astype(o_ref.dtype)


def _pick_planes(ncp, scratch_row_width_f32, target_bytes=2 * 1024 * 1024):
    """Largest multiple-of-8 divisor of ncp whose f32 scratch fits ~target,
    capped so the grid has >= 2 steps when possible (megacore / 2 TCs)."""
    per_plane = scratch_row_width_f32 * 4
    g = (target_bytes // max(per_plane, 1)) // 8 * 8
    g = max(8, min(ncp, g))
    if ncp >= 16:
        half = (ncp // 2) // 8 * 8
        if half >= 8:
            g = min(g, half)
    while ncp % g:
        g -= 8
    return g


def _smoothing_avg_pool_flat(x, kernel_size):
    N, C, H, W = x.shape
    k = kernel_size
    pad = k // 2
    HW = H * W
    NC = N * C

    # Pad plane count up to a multiple of 8 so the block sublane dim is legal.
    NCp = -(-NC // 8) * 8
    xf = x.reshape(NC, HW)
    if NCp != NC:
        xf = jnp.pad(xf, ((0, NCp - NC), (0, 0)))

    # Exact inverse valid-count map (same for every plane), computed once.
    ri = jnp.arange(H, dtype=jnp.int32)
    cj = jnp.arange(W, dtype=jnp.int32)
    rcnt = jnp.minimum(ri - pad + k, H) - jnp.maximum(ri - pad, 0)
    ccnt = jnp.minimum(cj - pad + k, W) - jnp.maximum(cj - pad, 0)
    inv_cnt = (1.0 / (rcnt[:, None] * ccnt[None, :]).astype(jnp.float32)
               ).reshape(1, HW)

    # Column-validity masks: mask[dj, p] = 1 iff 0 <= (p mod W) + dj - pad < W.
    col = jnp.tile(cj, H)                                        # (HW,)
    offs = jnp.arange(k, dtype=jnp.int32)[:, None] - pad         # (k, 1)
    cmask = ((col[None, :] + offs >= 0) &
             (col[None, :] + offs < W)).astype(jnp.float32)      # (k, HW)

    M = pad * (W + 1)                         # flat margin needed on each side
    ML = ((M + 127) // 128) * 128 if M > 0 else 0   # left margin, lane-aligned
    scratch_w = ML + HW + M

    G = _pick_planes(NCp, scratch_w)
    grid = (NCp // G,)

    kernel = functools.partial(
        _smooth_pool_flat_kernel,
        k=k, pad=pad, W=W, HW=HW, ML=ML, M=M, G=G)

    out = pl.pallas_call(
        kernel,
        out_shape=jax.ShapeDtypeStruct((NCp, HW), x.dtype),
        grid_spec=pltpu.PrefetchScalarGridSpec(
            num_scalar_prefetch=0,
            grid=grid,
            in_specs=[
                pl.BlockSpec((G, HW), lambda b: (b, 0)),
                pl.BlockSpec((1, HW), lambda b: (0, 0)),   # resident
                pl.BlockSpec((k, HW), lambda b: (0, 0)),   # resident
            ],
            out_specs=pl.BlockSpec((G, HW), lambda b: (b, 0)),
            scratch_shapes=[pltpu.VMEM((G, scratch_w), jnp.float32)],
        ),
        compiler_params=pltpu.CompilerParams(
            dimension_semantics=("parallel",),
            vmem_limit_bytes=48 * 1024 * 1024),
    )(xf, inv_cnt, cmask)

    return out[:NC].reshape(N, C, H, W)


# ---------------------------------------------------------------------------
# General fallback: even kernel_size (output larger than input) — 3-D layout
# ---------------------------------------------------------------------------
def _smooth_pool_nchw_kernel(x_ref, inv_cnt_ref, o_ref, xp_ref, *,
                             kernel_size, pad, H, W, Hp, Wp, H_out, W_out, B):
    # x_ref:       (B, H, W)         input block (unpadded)
    # inv_cnt_ref: (H_out, W_out)    precomputed exact 1/valid_count (f32)
    # o_ref:       (B, H_out, W_out) output block
    # xp_ref:      (B, Hp, Wp) f32   zero-padded planes scratch

    if pad > 0:
        zrow = jnp.zeros((B, pad, Wp), jnp.float32)
        xp_ref[:, 0:pad, :] = zrow
        xp_ref[:, Hp - pad:Hp, :] = zrow
        zcol = jnp.zeros((B, H, pad), jnp.float32)
        xp_ref[:, pad:pad + H, 0:pad] = zcol
        xp_ref[:, pad:pad + H, Wp - pad:Wp] = zcol

    xp_ref[:, pad:pad + H, pad:pad + W] = x_ref[...].astype(jnp.float32)

    rows = xp_ref[:, 0:H_out, :]
    for di in range(1, kernel_size):
        rows = rows + xp_ref[:, di:di + H_out, :]

    acc = rows[:, :, 0:W_out]
    for dj in range(1, kernel_size):
        acc = acc + rows[:, :, dj:dj + W_out]

    o_ref[...] = (acc * inv_cnt_ref[...]).astype(o_ref.dtype)


def _pick_block_planes(nc, hp, wp, target_bytes=2 * 1024 * 1024):
    plane_bytes = hp * wp * 4
    b = max(1, min(nc, target_bytes // max(plane_bytes, 1)))
    if nc >= 2:
        b = min(b, max(1, nc // 2))
    while nc % b:
        b -= 1
    return b


def _smoothing_avg_pool_nchw(x, kernel_size):
    N, C, H, W = x.shape
    k = kernel_size
    pad = k // 2
    Hp, Wp = H + 2 * pad, W + 2 * pad
    H_out = H + 2 * pad - k + 1
    W_out = W + 2 * pad - k + 1
    NC = N * C

    xf = x.reshape(NC, H, W)

    ri = jnp.arange(H_out, dtype=jnp.int32)
    cj = jnp.arange(W_out, dtype=jnp.int32)
    rcnt = jnp.minimum(ri - pad + k, H) - jnp.maximum(ri - pad, 0)
    ccnt = jnp.minimum(cj - pad + k, W) - jnp.maximum(cj - pad, 0)
    inv_cnt = 1.0 / (rcnt[:, None] * ccnt[None, :]).astype(jnp.float32)

    B = _pick_block_planes(NC, Hp, Wp)
    grid = (NC // B,)

    kernel = functools.partial(
        _smooth_pool_nchw_kernel,
        kernel_size=k, pad=pad, H=H, W=W, Hp=Hp, Wp=Wp,
        H_out=H_out, W_out=W_out, B=B)

    out = pl.pallas_call(
        kernel,
        out_shape=jax.ShapeDtypeStruct((NC, H_out, W_out), x.dtype),
        grid_spec=pltpu.PrefetchScalarGridSpec(
            num_scalar_prefetch=0,
            grid=grid,
            in_specs=[
                pl.BlockSpec((B, H, W), lambda b: (b, 0, 0)),
                pl.BlockSpec((H_out, W_out), lambda b: (0, 0)),  # resident
            ],
            out_specs=pl.BlockSpec((B, H_out, W_out), lambda b: (b, 0, 0)),
            scratch_shapes=[pltpu.VMEM((B, Hp, Wp), jnp.float32)],
        ),
        compiler_params=pltpu.CompilerParams(
            dimension_semantics=("parallel",),
            vmem_limit_bytes=48 * 1024 * 1024),
    )(xf, inv_cnt)

    return out.reshape(N, C, H_out, W_out)


# ---------------------------------------------------------------------------
# Public entry point (matches SmoothingAvgPooling.forward)
# ---------------------------------------------------------------------------
def smoothing_avg_pooling(x, kernel_size):
    """Pallas TPU equivalent of
       F.avg_pool2d(x, kernel_size, stride=1, padding=kernel_size//2,
                    count_include_pad=False),  x: (N, C, H, W)."""
    if kernel_size % 2 == 1:
        return _smoothing_avg_pool_flat(x, kernel_size)
    return _smoothing_avg_pool_nchw(x, kernel_size)


def _reference_avg_pool(x, kernel_size):
    """Pure-JAX reference: avg_pool2d, stride=1, pad=k//2, count_include_pad=False."""
    pad = kernel_size // 2
    window = (1, 1, kernel_size, kernel_size)
    strides = (1, 1, 1, 1)
    padding = ((0, 0), (0, 0), (pad, pad), (pad, pad))
    s = lax.reduce_window(x.astype(jnp.float32), 0.0, lax.add, window, strides, padding)
    ones = jnp.ones_like(x, dtype=jnp.float32)
    c = lax.reduce_window(ones, 0.0, lax.add, window, strides, padding)
    return (s / c).astype(x.dtype)


if __name__ == "__main__":
    key = jax.random.PRNGKey(0)
    N, C, H, W = 2, 4, 16, 16
    x = jax.random.normal(key, (N, C, H, W), dtype=jnp.float32)

    # k=3 and k=5 exercise the lane-dense flat fast path; k=2 the 3-D fallback.
    for ksz in (3, 5, 2):
        y = jax.block_until_ready(smoothing_avg_pooling(x, ksz))
        y_ref = _reference_avg_pool(x, ksz)
        assert y.shape == y_ref.shape, (ksz, y.shape, y_ref.shape)
        assert jnp.allclose(y, y_ref, atol=1e-5, rtol=1e-5), f"mismatch k={ksz}"

    print("KERNEL_OK")
</pallas_src>

<mosaic_0001>
module attributes {stable_mosaic.version = 11 : i64} {
  func.func @_smooth_pool_flat_kernel(%arg0: i32, %arg1: memref<8x256xf32, #tpu.memory_space<vmem>>, %arg2: memref<1x256xf32, #tpu.memory_space<vmem>>, %arg3: memref<3x256xf32, #tpu.memory_space<vmem>>, %arg4: memref<8x256xf32, #tpu.memory_space<vmem>>, %arg5: memref<8x401xf32, #tpu.memory_space<vmem>>) attributes {dimension_semantics = [#tpu.dimension_semantics<parallel>], iteration_bounds = array<i64: 1>, scalar_prefetch = 0 : i64, scratch_operands = 1 : i64, tpu.core_type = #tpu.core_type<tc>, window_params = [{transform_indices = @transform_0, window_bounds = array<i64: 8, 256>}, {pipeline_mode = #tpu.pipeline_mode<synchronous>, transform_indices = @transform_1, window_bounds = array<i64: 1, 256>}, {pipeline_mode = #tpu.pipeline_mode<synchronous>, transform_indices = @transform_2, window_bounds = array<i64: 3, 256>}, {transform_indices = @transform_3, window_bounds = array<i64: 8, 256>}]} {
    %cst = arith.constant 0.000000e+00 : f32
    %0 = vector.broadcast %cst : f32 to vector<8x128xf32>
    %c0 = arith.constant 0 : index
    %c0_0 = arith.constant 0 : index
    %1 = vector.load %arg5[%c0, %c0_0] : memref<8x401xf32, #tpu.memory_space<vmem>>, vector<8x128xf32>
    tpu.vector_store %arg5[%c0, %c0_0], %0 {strides = array<i32>} : memref<8x401xf32, #tpu.memory_space<vmem>>, vector<8x128xf32>,
    %cst_1 = arith.constant 0.000000e+00 : f32
    %2 = vector.broadcast %cst_1 : f32 to vector<8x17xf32>
    %c0_2 = arith.constant 0 : index
    %c384 = arith.constant 384 : index
    %3 = vector.load %arg5[%c0_2, %c384] : memref<8x401xf32, #tpu.memory_space<vmem>>, vector<8x17xf32>
    tpu.vector_store %arg5[%c0_2, %c384], %2 {strides = array<i32>} : memref<8x401xf32, #tpu.memory_space<vmem>>, vector<8x17xf32>,
    %c0_3 = arith.constant 0 : index
    %c0_4 = arith.constant 0 : index
    %4 = vector.load %arg1[%c0_3, %c0_4] : memref<8x256xf32, #tpu.memory_space<vmem>>, vector<8x256xf32>
    %c0_5 = arith.constant 0 : index
    %c128 = arith.constant 128 : index
    %5 = vector.load %arg5[%c0_5, %c128] : memref<8x401xf32, #tpu.memory_space<vmem>>, vector<8x256xf32>
    tpu.vector_store %arg5[%c0_5, %c128], %4 {strides = array<i32>} : memref<8x401xf32, #tpu.memory_space<vmem>>, vector<8x256xf32>,
    %c0_6 = arith.constant 0 : index
    %c111 = arith.constant 111 : index
    %6 = vector.load %arg5[%c0_6, %c111] : memref<8x401xf32, #tpu.memory_space<vmem>>, vector<8x258xf32>
    %c0_7 = arith.constant 0 : index
    %c127 = arith.constant 127 : index
    %7 = vector.load %arg5[%c0_7, %c127] : memref<8x401xf32, #tpu.memory_space<vmem>>, vector<8x258xf32>
    %8 = arith.addf %6, %7 : vector<8x258xf32>
    %c0_8 = arith.constant 0 : index
    %c143 = arith.constant 143 : index
    %9 = vector.load %arg5[%c0_8, %c143] : memref<8x401xf32, #tpu.memory_space<vmem>>, vector<8x258xf32>
    %10 = arith.addf %8, %9 : vector<8x258xf32>
    %11 = vector.extract_strided_slice %10 {offsets = [0, 0], sizes = [8, 256], strides = [1, 1]} : vector<8x258xf32> to vector<8x256xf32>
    %c0_9 = arith.constant 0 : index
    %c0_10 = arith.constant 0 : index
    %12 = vector.load %arg3[%c0_9, %c0_10] : memref<3x256xf32, #tpu.memory_space<vmem>>, vector<1x256xf32>
    %13 = vector.broadcast %12 : vector<1x256xf32> to vector<8x256xf32>
    %14 = arith.mulf %11, %13 : vector<8x256xf32>
    %15 = vector.extract_strided_slice %10 {offsets = [0, 1], sizes = [8, 256], strides = [1, 1]} : vector<8x258xf32> to vector<8x256xf32>
    %16 = arith.addf %14, %15 : vector<8x256xf32>
    %17 = vector.extract_strided_slice %10 {offsets = [0, 2], sizes = [8, 256], strides = [1, 1]} : vector<8x258xf32> to vector<8x256xf32>
    %c2 = arith.constant 2 : index
    %c0_11 = arith.constant 0 : index
    %18 = vector.load %arg3[%c2, %c0_11] : memref<3x256xf32, #tpu.memory_space<vmem>>, vector<1x256xf32>
    %19 = vector.broadcast %18 : vector<1x256xf32> to vector<8x256xf32>
    %20 = arith.mulf %17, %19 : vector<8x256xf32>
    %21 = arith.addf %16, %20 : vector<8x256xf32>
    %c0_12 = arith.constant 0 : index
    %c0_13 = arith.constant 0 : index
    %22 = vector.load %arg2[%c0_12, %c0_13] : memref<1x256xf32, #tpu.memory_space<vmem>>, vector<1x256xf32>
    %23 = vector.broadcast %22 : vector<1x256xf32> to vector<8x256xf32>
    %24 = arith.mulf %21, %23 : vector<8x256xf32>
    %c0_14 = arith.constant 0 : index
    %c0_15 = arith.constant 0 : index
    %25 = vector.load %arg4[%c0_14, %c0_15] : memref<8x256xf32, #tpu.memory_space<vmem>>, vector<8x256xf32>
    tpu.vector_store %arg4[%c0_14, %c0_15], %24 {strides = array<i32>} : memref<8x256xf32, #tpu.memory_space<vmem>>, vector<8x256xf32>,
    return
  }
  func.func @transform_0(%arg0: i32) -> (i32, i32) {
    %c0_i32 = arith.constant 0 : i32
    %c0_i32_0 = arith.constant 0 : i32
    return %arg0, %c0_i32 : i32, i32
  }
  func.func @transform_1(%arg0: i32) -> (i32, i32) {
    %c0_i32 = arith.constant 0 : i32
    %c0_i32_0 = arith.constant 0 : i32
    %c0_i32_1 = arith.constant 0 : i32
    return %c0_i32, %c0_i32_0 : i32, i32
  }
  func.func @transform_2(%arg0: i32) -> (i32, i32) {
    %c0_i32 = arith.constant 0 : i32
    %c0_i32_0 = arith.constant 0 : i32
    %c0_i32_1 = arith.constant 0 : i32
    return %c0_i32, %c0_i32_0 : i32, i32
  }
  func.func @transform_3(%arg0: i32) -> (i32, i32) {
    %c0_i32 = arith.constant 0 : i32
    %c0_i32_0 = arith.constant 0 : i32
    return %arg0, %c0_i32 : i32, i32
  }
}

</mosaic_0001>

<llo_original>
// kernel: tpu_custom_call.1
$region0: #{tpu_custom_call.1}
  #allocation0 [shape = 'u32[]', space=smem, size = 0x4, offset = 0x4, fixed_abs, tag = 'smem constant byte address 0x4 - core index']
  #allocation1 [shape = 'u32[144,128]{1,0:T(1,128)}', space=vmem, size = 0x12000, scoped, tag = 'internal scratch']
  #allocation2 [shape = 'f32[8,401]{1,0:T(8,128)}', space=vmem, size = 0x4000, scoped, tag = 'scratch operand']
  %s0 = inlined_call_operand.hbm [shape: f32[8,256], index: 0, kind: input, shape index: {}]
  %s1 = inlined_call_operand.hbm [shape: f32[1,256], index: 1, kind: input, shape index: {}]
  %s2 = inlined_call_operand.hbm [shape: f32[3,256], index: 2, kind: input, shape index: {}]
  %s3 = inlined_call_operand.hbm [shape: f32[8,256], index: 3, kind: output, shape index: {}]
  %s4 = sld [smem:[#allocation0]]
  $region34: #{tpu_custom_call.1} parent=0
    _
  %s6 = ssub.s32 1, %s4
  %s7 = scalar_select 0, %s6, %s4
  $region1: #{tpu_custom_call.1} parent=0
    #allocation3 [shape = 'u8[8192]{0}', space=vmem, size = 0x2000, scoped, tag = 'input window, operand 0, single buffered']
    #allocation4 [shape = 's32[1]{0}', space=sflag, size = 0x4, scoped, tag = 'scoped memory for tpu_custom_call.1']
    #allocation5 [shape = 's32[1]{0}', space=sflag, size = 0x4, scoped, tag = 'scoped memory for tpu_custom_call.1']
    #allocation6 [shape = 'u8[1024]{0}', space=vmem, size = 0x400, scoped, tag = 'input window, operand 1, single buffered']
    #allocation7 [shape = 's32[1]{0}', space=sflag, size = 0x4, scoped, tag = 'scoped memory for tpu_custom_call.1']
    #allocation8 [shape = 'u8[4096]{0}', space=vmem, size = 0x1000, scoped, tag = 'input window, operand 2, single buffered']
    #allocation9 [shape = 'u8[8192]{0}', space=vmem, size = 0x2000, scoped, tag = 'output window, operand 0, single buffered']
    %8 = vsyncpa [#allocation4], 0
    %9 = vsyncpa [#allocation7], 0
    %10 = vsyncpa [#allocation5], 0
    // Predicated region
    $region2: #{tpu_custom_call.1} parent=1 // pred_check
      _
    $region3: #{tpu_custom_call.1} parent=1 // pred_check_branch
      %12 = sbr.rel (0) target = $region5
    $region4: #{tpu_custom_call.1} parent=1 // pred_region
      %s14 = ssub.s32 256, 256
      %15 = vsyncadd [#allocation4], %s14
      %s17 = sshll.u32 [#allocation3], 4
      %s18 = int_to_ptr.vmem [resolvable:$true] %s17
      %20 = dma.hbm_to_vmem [thread:$0]  %s0, 256, %s18, [#allocation4]
    $region5: #{tpu_custom_call.1} parent=1 // pred_fallthru
      _
    // Predicated region
    $region6: #{tpu_custom_call.1} parent=1 // pred_check
      _
    $region7: #{tpu_custom_call.1} parent=1 // pred_check_branch
      %22 = sbr.rel (0) target = $region9
    $region8: #{tpu_custom_call.1} parent=1 // pred_region
      %s24 = ssub.s32 32, 32
      %25 = vsyncadd [#allocation7], %s24
      %s27 = sshll.u32 [#allocation6], 4
      %s28 = int_to_ptr.vmem [resolvable:$true] %s27
      %30 = dma.hbm_to_vmem [thread:$0]  %s1, 32, %s28, [#allocation7]
    $region9: #{tpu_custom_call.1} parent=1 // pred_fallthru
      _
    // Predicated region
    $region10: #{tpu_custom_call.1} parent=1 // pred_check
      _
    $region11: #{tpu_custom_call.1} parent=1 // pred_check_branch
      %32 = sbr.rel (0) target = $region13
    $region12: #{tpu_custom_call.1} parent=1 // pred_region
      %s34 = ssub.s32 128, 128
      %35 = vsyncadd [#allocation7], %s34
      %s37 = sshll.u32 [#allocation8], 4
      %s38 = int_to_ptr.vmem [resolvable:$true] %s37
      %40 = dma.hbm_to_vmem [thread:$0]  %s2, 128, %s38, [#allocation7]
    $region13: #{tpu_custom_call.1} parent=1 // pred_fallthru
      _
    // Predicated region
    $region14: #{tpu_custom_call.1} parent=1 // pred_check
      _
    $region15: #{tpu_custom_call.1} parent=1 // pred_check_branch
      %42 = sbr.rel (0) target = $region17
    $region16: #{tpu_custom_call.1} parent=1 // pred_region
      %43 = dma.done [#allocation4], 256
    $region17: #{tpu_custom_call.1} parent=1 // pred_fallthru
      _
    // Predicated region
    $region18: #{tpu_custom_call.1} parent=1 // pred_check
      _
    $region19: #{tpu_custom_call.1} parent=1 // pred_check_branch
      %45 = sbr.rel (0) target = $region21
    $region20: #{tpu_custom_call.1} parent=1 // pred_region
      %46 = dma.done [#allocation7], 32
    $region21: #{tpu_custom_call.1} parent=1 // pred_fallthru
      _
    // Predicated region
    $region22: #{tpu_custom_call.1} parent=1 // pred_check
      _
    $region23: #{tpu_custom_call.1} parent=1 // pred_check_branch
      %48 = sbr.rel (0) target = $region25
    $region24: #{tpu_custom_call.1} parent=1 // pred_region
      %49 = dma.done [#allocation7], 128
    $region25: #{tpu_custom_call.1} parent=1 // pred_fallthru
      _
    %50 = vst [vmem:[#allocation2] sm:$0xff] 0.0
    %vm51 = vcmask 138240
    %52 = vst.msk [vmem:[#allocation2 + $0x18] sm:$0xff] %vm51, 0.0
    %v53 = vld [vmem:[#allocation3] sm:$0xff]
    %v54 = vld [vmem:[#allocation3 + $0x8] sm:$0xff]
    %55 = vst [vmem:[#allocation2 + $0x8] sm:$0xff] %v53
    %56 = vst [vmem:[#allocation2 + $0x10] sm:$0xff] %v54
    %v57 = vld [vmem:[#allocation2] sm:$0xff]
    %v58 = vld [vmem:[#allocation2 + $0x8] sm:$0xff]
    %v59 = vld [vmem:[#allocation2 + $0x10] sm:$0xff]
    %v60 = vld [vmem:[#allocation2 + $0x18] sm:$0xff]
    %65 = vrot.lane.b32.xlu0 %v57, 112
    %v66 = vpop.permute.xlu0 %65
    %67 = vrot.lane.b32.xlu0 %v58, 112
    %v68 = vpop.permute.xlu0 %67
    %69 = vrot.lane.b32.xlu0 %v59, 112
    %v70 = vpop.permute.xlu0 %69
    %71 = vrot.lane.b32.xlu0 %v60, 112
    %v72 = vpop.permute.xlu0 %71
    %vm73 = vcmask 916480
    %v74 = vsel %vm73, %v66, %v68
    %v75 = vsel %vm73, %v68, %v70
    %v76 = vsel %vm73, %v70, %v72
    %v80 = vadd.f32 %v57, %v74
    %v81 = vadd.f32 %v58, %v75
    %v82 = vadd.f32 %v59, %v76
    %83 = vrot.lane.b32.xlu0 %v58, 96
    %v84 = vpop.permute.xlu0 %83
    %85 = vrot.lane.b32.xlu0 %v59, 96
    %v86 = vpop.permute.xlu0 %85
    %87 = vrot.lane.b32.xlu0 %v60, 96
    %v88 = vpop.permute.xlu0 %87
    %vm89 = vcmask 785408
    %v90 = vsel %vm89, %v84, %v86
    %v91 = vsel %vm89, %v86, %v88
    %v95 = vadd.f32 %v80, %v84
    %v96 = vadd.f32 %v81, %v90
    %v97 = vadd.f32 %v82, %v91
    %v98 = vld [vmem:[#allocation8] ss:$4 sm:$0x3]
    %v100 = vlaneseq
    %v101 = vshrl.u32 %v100, 7
    %v102 = vsub.s32 0, %v101
    %v103 = vrot.slane %v98, %v102
    %v104 = vlaneseq
    %v105 = vshrl.u32 %v104, 7
    %v106 = vsub.s32 1, %v105
    %v107 = vrot.slane %v98, %v106
    %108 = vrot.lane.b32.xlu0 %v103, 111
    %v109 = vpop.permute.xlu0 %108
    %110 = vrot.lane.b32.xlu0 %v107, 111
    %v111 = vpop.permute.xlu0 %110
    %vm112 = vcmask 908288
    %v113 = vsel %vm112, %v109, %v111
    %v117 = vmul.f32 %v95, %v109
    %v118 = vmul.f32 %v96, %v113
    %v119 = vmul.f32 %v97, %v111
    %123 = vrot.lane.b32.xlu0 %v95, 127
    %v124 = vpop.permute.xlu0 %123
    %125 = vrot.lane.b32.xlu0 %v96, 127
    %v126 = vpop.permute.xlu0 %125
    %127 = vrot.lane.b32.xlu0 %v97, 127
    %v128 = vpop.permute.xlu0 %127
    %vm129 = vcmask 1039360
    %v130 = vsel %vm129, %v124, %v126
    %v131 = vsel %vm129, %v126, %v128
    %v135 = vadd.f32 %v117, %v130
    %v136 = vadd.f32 %v118, %v131
    %v137 = vadd.f32 %v119, %v128
    %s138 = scalar_lea.vmem [#allocation8], 2
    %v139 = vld [vmem:[%s138] ss:$4 sm:$0x3]
    %v141 = vlaneseq
    %v142 = vshrl.u32 %v141, 7
    %v143 = vsub.s32 0, %v142
    %v144 = vrot.slane %v139, %v143
    %v145 = vlaneseq
    %v146 = vshrl.u32 %v145, 7
    %v147 = vsub.s32 1, %v146
    %v148 = vrot.slane %v139, %v147
    %149 = vrot.lane.b32.xlu0 %v144, 113
    %v150 = vpop.permute.xlu0 %149
    %151 = vrot.lane.b32.xlu0 %v148, 113
    %v152 = vpop.permute.xlu0 %151
    %vm153 = vcmask 924672
    %v154 = vsel %vm153, %v150, %v152
    %v158 = vmul.f32 %v95, %v150
    %v159 = vmul.f32 %v96, %v154
    %v160 = vmul.f32 %v97, %v152
    %164 = vrot.lane.b32.xlu0 %v158, 126
    %v165 = vpop.permute.xlu0 %164
    %166 = vrot.lane.b32.xlu0 %v159, 126
    %v167 = vpop.permute.xlu0 %166
    %168 = vrot.lane.b32.xlu0 %v160, 126
    %v169 = vpop.permute.xlu0 %168
    %vm170 = vcmask 1031168
    %v171 = vsel %vm170, %v165, %v167
    %v172 = vsel %vm170, %v167, %v169
    %v176 = vadd.f32 %v135, %v171
    %v177 = vadd.f32 %v136, %v172
    %v178 = vadd.f32 %v137, %v169
    %v179 = vld [vmem:[#allocation6] sm:$0x3]
    %v181 = vlaneseq
    %v182 = vshrl.u32 %v181, 7
    %v183 = vsub.s32 0, %v182
    %v184 = vrot.slane %v179, %v183
    %v185 = vlaneseq
    %v186 = vshrl.u32 %v185, 7
    %v187 = vsub.s32 1, %v186
    %v188 = vrot.slane %v179, %v187
    %189 = vrot.lane.b32.xlu0 %v184, 111
    %v190 = vpop.permute.xlu0 %189
    %191 = vrot.lane.b32.xlu0 %v188, 111
    %v192 = vpop.permute.xlu0 %191
    %v193 = vsel %vm112, %v190, %v192
    %v197 = vmul.f32 %v176, %v190
    %v198 = vmul.f32 %v177, %v193
    %v199 = vmul.f32 %v178, %v192
    %203 = vrot.lane.b32.xlu0 %v197, 17
    %v204 = vpop.permute.xlu0 %203
    %205 = vrot.lane.b32.xlu0 %v198, 17
    %v206 = vpop.permute.xlu0 %205
    %207 = vrot.lane.b32.xlu0 %v199, 17
    %v208 = vpop.permute.xlu0 %207
    %v209 = vsel %vm51, %v204, %v206
    %v210 = vsel %vm51, %v206, %v208
    %213 = vst [vmem:[#allocation9] sm:$0xff] %v209
    %214 = vst [vmem:[#allocation9 + $0x8] sm:$0xff] %v210
    // Predicated region
    $region26: #{tpu_custom_call.1} parent=1 // pred_check
      _
    $region27: #{tpu_custom_call.1} parent=1 // pred_check_branch
      %216 = sbr.rel (0) target = $region29
    $region28: #{tpu_custom_call.1} parent=1 // pred_region
      %s218 = ssub.s32 256, 256
      %219 = vsyncadd [#allocation5], %s218
      %s221 = sshll.u32 [#allocation9], 4
      %s222 = int_to_ptr.vmem [resolvable:$true] %s221
      %224 = dma.vmem_to_hbm [thread:$0]  %s222, 256, %s3, [#allocation5]
    $region29: #{tpu_custom_call.1} parent=1 // pred_fallthru
      _
    // Predicated region
    $region30: #{tpu_custom_call.1} parent=1 // pred_check
      _
    $region31: #{tpu_custom_call.1} parent=1 // pred_check_branch
      %226 = sbr.rel (0) target = $region33
    $region32: #{tpu_custom_call.1} parent=1 // pred_region
      %227 = dma.done [#allocation5], 256
    $region33: #{tpu_custom_call.1} parent=1 // pred_fallthru
      _
    %228 = vsyncpa [#allocation4], 1
    %229 = vsyncpa [#allocation7], 1
    %230 = vsyncpa [#allocation5], 1

</llo_original>
